<compile_context>
chip_gen: v5e
topology: v5e:2x2
jax: 0.10.0
libtpu: 0.0.40
codegen_flags: <defaults>
</compile_context>

<pallas_src>
import functools

import jax
import jax.numpy as jnp
import numpy as np
from jax import lax
from jax.experimental import pallas as pl
from jax.experimental.pallas import tpu as pltpu


def _zero_param_kernel(ft_ref, fs_ref, wlin_ref, wq_ref, bq_ref,
                       fta_ref, fsp_ref, *,
                       bb, n1, n2, num_heads, head_dim, compute_dtype):
    cd = compute_dtype
    dim_out = num_heads * head_dim

    # Constant operands (already pre-transposed / pre-cast / pre-scaled).
    wlin = wlin_ref[...]                       # (dim_v, dim_t)   compute dtype
    wq = wq_ref[...]                           # (dim_t, dim_out) compute dtype, *scale
    bq = bq_ref[...]                           # (1, dim_out)     f32, *scale

    # ---- F_s projection + L2 normalize: one tall matmul over bb*N2 rows ----
    fs = fs_ref[...]                           # (bb*N2, dim_v), compute dtype
    fs_p = jnp.dot(fs, wlin, preferred_element_type=jnp.float32)   # (bb*N2, dim_t) f32
    fs_p = fs_p * lax.rsqrt(jnp.sum(fs_p * fs_p, axis=-1, keepdims=True))
    fsp_ref[...] = fs_p.astype(fsp_ref.dtype)  # single store for the whole block

    # ---- q projection (Conv1d k=1): one tall matmul, bias added once ----
    ft = ft_ref[...]                           # (bb*N1, dim_t), input dtype
    q = jnp.dot(ft.astype(cd), wq, preferred_element_type=jnp.float32) + bq

    q3 = q.astype(cd).reshape(bb, n1, dim_out)       # leading split (N1 % 8 == 0)
    k3 = fs_p.astype(cd).reshape(bb, n2, dim_out)    # k_s == v_s == normalized F_s

    # ---- attention: batched over bb, static loop only over heads ----
    heads = []
    for h in range(num_heads):
        sl = slice(h * head_dim, (h + 1) * head_dim)
        qh = q3[:, :, sl]                      # (bb, N1, hd)
        kh = k3[:, :, sl]                      # (bb, N2, hd)
        logits = lax.dot_general(              # 'bqd,bkd->bqk'
            qh, kh, (((2,), (2,)), ((0,), (0,))),
            preferred_element_type=jnp.float32)          # (bb, N1, N2) f32
        logits = logits - jnp.max(logits, axis=-1, keepdims=True)
        p = jnp.exp(logits)
        p = p * pl.reciprocal(jnp.sum(p, axis=-1, keepdims=True), approx=True)
        heads.append(lax.dot_general(          # 'bqk,bkd->bqd'
            p.astype(cd), kh, (((2,), (1,)), ((0,), (0,))),
            preferred_element_type=jnp.float32))         # (bb, N1, hd) f32

    attn = jnp.concatenate(heads, axis=-1)     # (bb, N1, dim_out)

    # Residual + L2 normalize (rsqrt -> EUP), single store.
    fta = attn.reshape(bb * n1, dim_out) + ft.astype(jnp.float32)
    fta = fta * lax.rsqrt(jnp.sum(fta * fta, axis=-1, keepdims=True))
    fta_ref[...] = fta.astype(fta_ref.dtype)


def _pick_batch_block(B, N1, N2, dim_t, dim_v, dim_out,
                      ft_bytes, fs_bytes, out_bytes,
                      vmem_budget_bytes, cap=16):
    """Pick how many batch elements to fold into one grid step.

    Bounded (<= cap) so the static structure stays small, VMEM-budgeted with
    double-buffered I/O blocks + f32 temporaries, legal w.r.t. the (8, 128)
    block constraint, and keeps >= 2 grid steps when B >= 2 (v7x megacore).
    """
    def step_bytes(bb):
        io = 2 * bb * (N1 * dim_t * ft_bytes + N2 * dim_v * fs_bytes
                       + (N1 * dim_out + N2 * dim_t) * out_bytes)
        temps = 4 * bb * (N2 * dim_t            # fs_p (f32)
                          + 2 * N1 * dim_out    # q, fta (f32)
                          + N1 * N2             # one head's logits (f32)
                          + N1 * dim_out)       # concatenated heads (f32)
        return io + 2 * temps                   # slack for bf16 copies etc.

    def legal(bb):
        return (((bb * N1) % 8 == 0 or bb == B)
                and ((bb * N2) % 8 == 0 or bb == B))

    cands = [bb for bb in range(1, B + 1)
             if B % bb == 0 and bb <= max(1, cap) and legal(bb)]
    if not cands:
        return B                                # full-array block is always legal
    fits = [bb for bb in cands if step_bytes(bb) <= vmem_budget_bytes]
    if not fits:
        fits = [min(cands)]
    multi = [bb for bb in fits if B // bb >= 2]  # keep both v7x TCs busy
    pool = multi or fits
    return max(pool)


def zero_parameter_forward(F_t, F_s, layer, params, *, num_heads,
                           batch_block=None, compute_dtype=jnp.bfloat16,
                           vmem_budget_bytes=4 << 20):
    """Pallas implementation of Zero_Parameter.forward.

    F_t: (B, N1, dim_t)   F_s: (B, N2, dim_v)   layer: static int
    params: 'w_lin' (k, dim_t, dim_v), 'w_q' (dim_out, dim_t), 'b_q' (dim_out,)
    compute_dtype: dtype of MXU operands (accumulation is f32). None -> input dtype.
    Returns (F_t_a (B, N1, dim_out), F_s_proj (B, N2, dim_t)).
    """
    B, N1, dim_t = F_t.shape
    B2, N2, dim_v = F_s.shape
    assert B == B2

    w_q = params["w_q"]
    b_q = params["b_q"]
    dim_out = w_q.shape[0]
    assert dim_out % num_heads == 0
    assert dim_out == dim_t, "residual add requires dim_out == dim_t"
    head_dim = dim_out // num_heads
    scale = float(dim_out) ** (-0.5)
    out_dtype = F_t.dtype
    if compute_dtype is None:
        compute_dtype = F_t.dtype

    # One-time XLA-side weight prep: transpose, fold the softmax scale into the
    # q projection, cast MXU operands to compute dtype. Bias stays f32 (it is
    # added to the f32 accumulator).
    w_lin = jnp.transpose(params["w_lin"][layer]).astype(compute_dtype)   # (dim_v, dim_t)
    w_q_t = (jnp.transpose(w_q) * scale).astype(compute_dtype)            # (dim_t, dim_out)
    b_q_s = (b_q * scale).reshape(1, dim_out).astype(jnp.float32)         # (1, dim_out)

    # Flatten batch into the row (M) dimension; F_s is a pure matmul operand so
    # it can be pre-cast once (halves its DMA when compute dtype is bf16).
    ft2 = F_t.reshape(B * N1, dim_t)
    fs2 = F_s.reshape(B * N2, dim_v).astype(compute_dtype)

    if batch_block is None:
        batch_block = _pick_batch_block(
            B, N1, N2, dim_t, dim_v, dim_out,
            jnp.dtype(F_t.dtype).itemsize, jnp.dtype(compute_dtype).itemsize,
            jnp.dtype(out_dtype).itemsize, vmem_budget_bytes)
    bb = batch_block
    assert B % bb == 0
    grid = (B // bb,)

    kernel = functools.partial(
        _zero_param_kernel, bb=bb, n1=N1, n2=N2, num_heads=num_heads,
        head_dim=head_dim, compute_dtype=compute_dtype)

    grid_spec = pltpu.PrefetchScalarGridSpec(
        num_scalar_prefetch=0,
        grid=grid,
        in_specs=[
            pl.BlockSpec((bb * N1, dim_t), lambda g: (g, 0)),
            pl.BlockSpec((bb * N2, dim_v), lambda g: (g, 0)),
            pl.BlockSpec((dim_v, dim_t), lambda g: (0, 0)),
            pl.BlockSpec((dim_t, dim_out), lambda g: (0, 0)),
            pl.BlockSpec((1, dim_out), lambda g: (0, 0)),
        ],
        out_specs=[
            pl.BlockSpec((bb * N1, dim_out), lambda g: (g, 0)),
            pl.BlockSpec((bb * N2, dim_t), lambda g: (g, 0)),
        ],
    )

    out_shapes = (
        jax.ShapeDtypeStruct((B * N1, dim_out), out_dtype),
        jax.ShapeDtypeStruct((B * N2, dim_t), out_dtype),
    )

    fta2, fsp2 = pl.pallas_call(
        kernel,
        grid_spec=grid_spec,
        out_shape=out_shapes,
        compiler_params=pltpu.CompilerParams(
            dimension_semantics=("parallel",),
            vmem_limit_bytes=32 * 1024 * 1024),
    )(ft2, fs2, w_lin, w_q_t, b_q_s)

    return fta2.reshape(B, N1, dim_out), fsp2.reshape(B, N2, dim_t)


def _reference(F_t, F_s, layer, params, num_heads):
    """Pure-JAX reference mirroring the PyTorch forward."""
    B, N1, _ = F_t.shape
    _, N2, _ = F_s.shape
    w_lin = params["w_lin"][layer]
    w_q, b_q = params["w_q"], params["b_q"]
    dim_out = w_q.shape[0]
    head_dim = dim_out // num_heads
    scale = dim_out ** (-0.5)

    fs = jnp.einsum("bnv,tv->bnt", F_s, w_lin, precision="highest")
    fs = fs / jnp.linalg.norm(fs, axis=-1, keepdims=True)
    q = jnp.einsum("bnt,ot->bno", F_t, w_q, precision="highest") + b_q
    q = q.reshape(B, N1, num_heads, head_dim)
    k = fs.reshape(B, N2, num_heads, head_dim)
    attn = jnp.einsum("bnkc,bmkc->bknm", q, k, precision="highest") * scale
    attn = jax.nn.softmax(attn, axis=-1)
    out = jnp.einsum("bknm,bmkc->bnkc", attn, k, precision="highest")
    out = out.reshape(B, N1, dim_out) + F_t
    out = out / jnp.linalg.norm(out, axis=-1, keepdims=True)
    return out, fs


if __name__ == "__main__":
    # Small shapes consistent with the module (dim_t == dim_out is required by
    # the residual add / head reshape in the reference).
    B, N1, N2 = 2, 8, 16
    dim_v, dim_t, dim_out = 32, 32, 32
    num_heads, k = 4, 4
    layer = 1

    key = jax.random.PRNGKey(0)
    k_ft, k_fs, k_wl, k_wq, k_bq = jax.random.split(key, 5)

    F_t = jax.random.normal(k_ft, (B, N1, dim_t), dtype=jnp.float32)
    F_s = jax.random.normal(k_fs, (B, N2, dim_v), dtype=jnp.float32)

    params = {
        # k Linear(dim_v, dim_t, bias=False): weight (dim_t, dim_v)
        "w_lin": jax.random.normal(k_wl, (k, dim_t, dim_v), dtype=jnp.float32) * 0.1,
        # Conv1d(dim_t, dim_out, kernel_size=1): weight (dim_out, dim_t), bias (dim_out,)
        "w_q": jax.random.normal(k_wq, (dim_out, dim_t), dtype=jnp.float32) * 0.1,
        "b_q": jax.random.normal(k_bq, (dim_out,), dtype=jnp.float32) * 0.1,
    }

    ref_fta, ref_fsp = _reference(F_t, F_s, layer, params, num_heads)

    # Default path: bf16 MXU operands, f32 accumulation / softmax / norms.
    fta, fsp = zero_parameter_forward(F_t, F_s, layer, params, num_heads=num_heads)
    jax.block_until_ready((fta, fsp))
    np.testing.assert_allclose(np.asarray(fsp), np.asarray(ref_fsp), rtol=2e-2, atol=2e-2)
    np.testing.assert_allclose(np.asarray(fta), np.asarray(ref_fta), rtol=2e-2, atol=2e-2)

    # Full-precision operand path (tighter check).
    fta32, fsp32 = zero_parameter_forward(
        F_t, F_s, layer, params, num_heads=num_heads, compute_dtype=jnp.float32)
    jax.block_until_ready((fta32, fsp32))
    np.testing.assert_allclose(np.asarray(fsp32), np.asarray(ref_fsp), rtol=1e-2, atol=1e-2)
    np.testing.assert_allclose(np.asarray(fta32), np.asarray(ref_fta), rtol=1e-2, atol=1e-2)

    print("KERNEL_OK")
</pallas_src>

<mosaic_0001>
module attributes {stable_mosaic.version = 11 : i64} {
  func.func @_zero_param_kernel(%arg0: i32, %arg1: memref<8x32xf32, #tpu.memory_space<vmem>>, %arg2: memref<16x32xbf16, #tpu.memory_space<vmem>>, %arg3: memref<32x32xbf16, #tpu.memory_space<vmem>>, %arg4: memref<32x32xbf16, #tpu.memory_space<vmem>>, %arg5: memref<1x32xf32, #tpu.memory_space<vmem>>, %arg6: memref<8x32xf32, #tpu.memory_space<vmem>>, %arg7: memref<16x32xf32, #tpu.memory_space<vmem>>) attributes {dimension_semantics = [#tpu.dimension_semantics<parallel>], iteration_bounds = array<i64: 2>, scalar_prefetch = 0 : i64, scratch_operands = 0 : i64, tpu.core_type = #tpu.core_type<tc>, window_params = [{transform_indices = @transform_0, window_bounds = array<i64: 8, 32>}, {transform_indices = @transform_1, window_bounds = array<i64: 16, 32>}, {pipeline_mode = #tpu.pipeline_mode<synchronous>, transform_indices = @transform_2, window_bounds = array<i64: 32, 32>}, {pipeline_mode = #tpu.pipeline_mode<synchronous>, transform_indices = @transform_3, window_bounds = array<i64: 32, 32>}, {pipeline_mode = #tpu.pipeline_mode<synchronous>, transform_indices = @transform_4, window_bounds = array<i64: 1, 32>}, {transform_indices = @transform_5, window_bounds = array<i64: 8, 32>}, {transform_indices = @transform_6, window_bounds = array<i64: 16, 32>}]} {
    %c0 = arith.constant 0 : index
    %c0_0 = arith.constant 0 : index
    %0 = vector.load %arg3[%c0, %c0_0] : memref<32x32xbf16, #tpu.memory_space<vmem>>, vector<32x32xbf16>
    %c0_1 = arith.constant 0 : index
    %c0_2 = arith.constant 0 : index
    %1 = vector.load %arg4[%c0_1, %c0_2] : memref<32x32xbf16, #tpu.memory_space<vmem>>, vector<32x32xbf16>
    %c0_3 = arith.constant 0 : index
    %c0_4 = arith.constant 0 : index
    %2 = vector.load %arg5[%c0_3, %c0_4] : memref<1x32xf32, #tpu.memory_space<vmem>>, vector<1x32xf32>
    %c0_5 = arith.constant 0 : index
    %c0_6 = arith.constant 0 : index
    %3 = vector.load %arg2[%c0_5, %c0_6] : memref<16x32xbf16, #tpu.memory_space<vmem>>, vector<16x32xbf16>
    %cst = arith.constant dense<0.000000e+00> : vector<16x32xf32>
    %4 = tpu.matmul %3, %0, %cst {dimension_numbers = #tpu.dot_dimension_numbers<[1], [0], [0], [1], [0, 0, 1, 1], [], []>} : vector<16x32xbf16>, vector<32x32xbf16>, vector<16x32xf32> -> vector<16x32xf32>
    %5 = arith.mulf %4, %4 : vector<16x32xf32>
    %cst_7 = arith.constant dense<0.000000e+00> : vector<16xf32>
    %6 = vector.multi_reduction <add>, %5, %cst_7 [1] : vector<16x32xf32> to vector<16xf32>
    %7 = vector.shape_cast %6 : vector<16xf32> to vector<16x1xf32>
    %8 = math.rsqrt %7 : vector<16x1xf32>
    %9 = vector.broadcast %8 : vector<16x1xf32> to vector<16x32xf32>
    %10 = arith.mulf %4, %9 : vector<16x32xf32>
    %c0_8 = arith.constant 0 : index
    %c0_9 = arith.constant 0 : index
    %11 = vector.load %arg7[%c0_8, %c0_9] : memref<16x32xf32, #tpu.memory_space<vmem>>, vector<16x32xf32>
    tpu.vector_store %arg7[%c0_8, %c0_9], %10 {strides = array<i32>} : memref<16x32xf32, #tpu.memory_space<vmem>>, vector<16x32xf32>,
    %c0_10 = arith.constant 0 : index
    %c0_11 = arith.constant 0 : index
    %12 = vector.load %arg1[%c0_10, %c0_11] : memref<8x32xf32, #tpu.memory_space<vmem>>, vector<8x32xf32>
    %13 = arith.truncf %12 : vector<8x32xf32> to vector<8x32xbf16>
    %cst_12 = arith.constant dense<0.000000e+00> : vector<8x32xf32>
    %14 = tpu.matmul %13, %1, %cst_12 {dimension_numbers = #tpu.dot_dimension_numbers<[1], [0], [0], [1], [0, 0, 1, 1], [], []>} : vector<8x32xbf16>, vector<32x32xbf16>, vector<8x32xf32> -> vector<8x32xf32>
    %15 = vector.broadcast %2 : vector<1x32xf32> to vector<8x32xf32>
    %16 = arith.addf %14, %15 : vector<8x32xf32>
    %17 = arith.truncf %16 : vector<8x32xf32> to vector<8x32xbf16>
    %18 = vector.shape_cast %17 : vector<8x32xbf16> to vector<1x8x32xbf16>
    %19 = arith.truncf %10 : vector<16x32xf32> to vector<16x32xbf16>
    %20 = vector.shape_cast %19 : vector<16x32xbf16> to vector<1x16x32xbf16>
    %21 = vector.extract_strided_slice %18 {offsets = [0, 0, 0], sizes = [1, 8, 8], strides = [1, 1, 1]} : vector<1x8x32xbf16> to vector<1x8x8xbf16>
    %22 = vector.extract_strided_slice %20 {offsets = [0, 0, 0], sizes = [1, 16, 8], strides = [1, 1, 1]} : vector<1x16x32xbf16> to vector<1x16x8xbf16>
    %cst_13 = arith.constant dense<0.000000e+00> : vector<1x8x16xf32>
    %23 = tpu.matmul %21, %22, %cst_13 {dimension_numbers = #tpu.dot_dimension_numbers<[2], [2], [1], [1], [0, 0, 0, 1, 1, 1], [0], [0]>} : vector<1x8x8xbf16>, vector<1x16x8xbf16>, vector<1x8x16xf32> -> vector<1x8x16xf32>
    %cst_14 = arith.constant dense<0xFF800000> : vector<1x8xf32>
    %24 = vector.multi_reduction <maximumf>, %23, %cst_14 [2] : vector<1x8x16xf32> to vector<1x8xf32>
    %25 = vector.shape_cast %24 : vector<1x8xf32> to vector<1x8x1xf32>
    %26 = vector.broadcast %25 : vector<1x8x1xf32> to vector<1x8x16xf32>
    %27 = arith.subf %23, %26 : vector<1x8x16xf32>
    %28 = math.exp %27 : vector<1x8x16xf32>
    %cst_15 = arith.constant dense<0.000000e+00> : vector<1x8xf32>
    %29 = vector.multi_reduction <add>, %28, %cst_15 [2] : vector<1x8x16xf32> to vector<1x8xf32>
    %30 = vector.shape_cast %29 : vector<1x8xf32> to vector<1x8x1xf32>
    %31 = tpu.reciprocal %30 {approx = true} : vector<1x8x1xf32> -> vector<1x8x1xf32>
    %32 = vector.broadcast %31 : vector<1x8x1xf32> to vector<1x8x16xf32>
    %33 = arith.mulf %28, %32 : vector<1x8x16xf32>
    %34 = arith.truncf %33 : vector<1x8x16xf32> to vector<1x8x16xbf16>
    %cst_16 = arith.constant dense<0.000000e+00> : vector<1x8x8xf32>
    %35 = tpu.matmul %34, %22, %cst_16 {dimension_numbers = #tpu.dot_dimension_numbers<[2], [1], [1], [2], [0, 0, 0, 1, 1, 2], [0], [0]>} : vector<1x8x16xbf16>, vector<1x16x8xbf16>, vector<1x8x8xf32> -> vector<1x8x8xf32>
    %36 = vector.extract_strided_slice %18 {offsets = [0, 0, 8], sizes = [1, 8, 8], strides = [1, 1, 1]} : vector<1x8x32xbf16> to vector<1x8x8xbf16>
    %37 = vector.extract_strided_slice %20 {offsets = [0, 0, 8], sizes = [1, 16, 8], strides = [1, 1, 1]} : vector<1x16x32xbf16> to vector<1x16x8xbf16>
    %cst_17 = arith.constant dense<0.000000e+00> : vector<1x8x16xf32>
    %38 = tpu.matmul %36, %37, %cst_17 {dimension_numbers = #tpu.dot_dimension_numbers<[2], [2], [1], [1], [0, 0, 0, 1, 1, 1], [0], [0]>} : vector<1x8x8xbf16>, vector<1x16x8xbf16>, vector<1x8x16xf32> -> vector<1x8x16xf32>
    %cst_18 = arith.constant dense<0xFF800000> : vector<1x8xf32>
    %39 = vector.multi_reduction <maximumf>, %38, %cst_18 [2] : vector<1x8x16xf32> to vector<1x8xf32>
    %40 = vector.shape_cast %39 : vector<1x8xf32> to vector<1x8x1xf32>
    %41 = vector.broadcast %40 : vector<1x8x1xf32> to vector<1x8x16xf32>
    %42 = arith.subf %38, %41 : vector<1x8x16xf32>
    %43 = math.exp %42 : vector<1x8x16xf32>
    %cst_19 = arith.constant dense<0.000000e+00> : vector<1x8xf32>
    %44 = vector.multi_reduction <add>, %43, %cst_19 [2] : vector<1x8x16xf32> to vector<1x8xf32>
    %45 = vector.shape_cast %44 : vector<1x8xf32> to vector<1x8x1xf32>
    %46 = tpu.reciprocal %45 {approx = true} : vector<1x8x1xf32> -> vector<1x8x1xf32>
    %47 = vector.broadcast %46 : vector<1x8x1xf32> to vector<1x8x16xf32>
    %48 = arith.mulf %43, %47 : vector<1x8x16xf32>
    %49 = arith.truncf %48 : vector<1x8x16xf32> to vector<1x8x16xbf16>
    %cst_20 = arith.constant dense<0.000000e+00> : vector<1x8x8xf32>
    %50 = tpu.matmul %49, %37, %cst_20 {dimension_numbers = #tpu.dot_dimension_numbers<[2], [1], [1], [2], [0, 0, 0, 1, 1, 2], [0], [0]>} : vector<1x8x16xbf16>, vector<1x16x8xbf16>, vector<1x8x8xf32> -> vector<1x8x8xf32>
    %51 = vector.extract_strided_slice %18 {offsets = [0, 0, 16], sizes = [1, 8, 8], strides = [1, 1, 1]} : vector<1x8x32xbf16> to vector<1x8x8xbf16>
    %52 = vector.extract_strided_slice %20 {offsets = [0, 0, 16], sizes = [1, 16, 8], strides = [1, 1, 1]} : vector<1x16x32xbf16> to vector<1x16x8xbf16>
    %cst_21 = arith.constant dense<0.000000e+00> : vector<1x8x16xf32>
    %53 = tpu.matmul %51, %52, %cst_21 {dimension_numbers = #tpu.dot_dimension_numbers<[2], [2], [1], [1], [0, 0, 0, 1, 1, 1], [0], [0]>} : vector<1x8x8xbf16>, vector<1x16x8xbf16>, vector<1x8x16xf32> -> vector<1x8x16xf32>
    %cst_22 = arith.constant dense<0xFF800000> : vector<1x8xf32>
    %54 = vector.multi_reduction <maximumf>, %53, %cst_22 [2] : vector<1x8x16xf32> to vector<1x8xf32>
    %55 = vector.shape_cast %54 : vector<1x8xf32> to vector<1x8x1xf32>
    %56 = vector.broadcast %55 : vector<1x8x1xf32> to vector<1x8x16xf32>
    %57 = arith.subf %53, %56 : vector<1x8x16xf32>
    %58 = math.exp %57 : vector<1x8x16xf32>
    %cst_23 = arith.constant dense<0.000000e+00> : vector<1x8xf32>
    %59 = vector.multi_reduction <add>, %58, %cst_23 [2] : vector<1x8x16xf32> to vector<1x8xf32>
    %60 = vector.shape_cast %59 : vector<1x8xf32> to vector<1x8x1xf32>
    %61 = tpu.reciprocal %60 {approx = true} : vector<1x8x1xf32> -> vector<1x8x1xf32>
    %62 = vector.broadcast %61 : vector<1x8x1xf32> to vector<1x8x16xf32>
    %63 = arith.mulf %58, %62 : vector<1x8x16xf32>
    %64 = arith.truncf %63 : vector<1x8x16xf32> to vector<1x8x16xbf16>
    %cst_24 = arith.constant dense<0.000000e+00> : vector<1x8x8xf32>
    %65 = tpu.matmul %64, %52, %cst_24 {dimension_numbers = #tpu.dot_dimension_numbers<[2], [1], [1], [2], [0, 0, 0, 1, 1, 2], [0], [0]>} : vector<1x8x16xbf16>, vector<1x16x8xbf16>, vector<1x8x8xf32> -> vector<1x8x8xf32>
    %66 = vector.extract_strided_slice %18 {offsets = [0, 0, 24], sizes = [1, 8, 8], strides = [1, 1, 1]} : vector<1x8x32xbf16> to vector<1x8x8xbf16>
    %67 = vector.extract_strided_slice %20 {offsets = [0, 0, 24], sizes = [1, 16, 8], strides = [1, 1, 1]} : vector<1x16x32xbf16> to vector<1x16x8xbf16>
    %cst_25 = arith.constant dense<0.000000e+00> : vector<1x8x16xf32>
    %68 = tpu.matmul %66, %67, %cst_25 {dimension_numbers = #tpu.dot_dimension_numbers<[2], [2], [1], [1], [0, 0, 0, 1, 1, 1], [0], [0]>} : vector<1x8x8xbf16>, vector<1x16x8xbf16>, vector<1x8x16xf32> -> vector<1x8x16xf32>
    %cst_26 = arith.constant dense<0xFF800000> : vector<1x8xf32>
    %69 = vector.multi_reduction <maximumf>, %68, %cst_26 [2] : vector<1x8x16xf32> to vector<1x8xf32>
    %70 = vector.shape_cast %69 : vector<1x8xf32> to vector<1x8x1xf32>
    %71 = vector.broadcast %70 : vector<1x8x1xf32> to vector<1x8x16xf32>
    %72 = arith.subf %68, %71 : vector<1x8x16xf32>
    %73 = math.exp %72 : vector<1x8x16xf32>
    %cst_27 = arith.constant dense<0.000000e+00> : vector<1x8xf32>
    %74 = vector.multi_reduction <add>, %73, %cst_27 [2] : vector<1x8x16xf32> to vector<1x8xf32>
    %75 = vector.shape_cast %74 : vector<1x8xf32> to vector<1x8x1xf32>
    %76 = tpu.reciprocal %75 {approx = true} : vector<1x8x1xf32> -> vector<1x8x1xf32>
    %77 = vector.broadcast %76 : vector<1x8x1xf32> to vector<1x8x16xf32>
    %78 = arith.mulf %73, %77 : vector<1x8x16xf32>
    %79 = arith.truncf %78 : vector<1x8x16xf32> to vector<1x8x16xbf16>
    %cst_28 = arith.constant dense<0.000000e+00> : vector<1x8x8xf32>
    %80 = tpu.matmul %79, %67, %cst_28 {dimension_numbers = #tpu.dot_dimension_numbers<[2], [1], [1], [2], [0, 0, 0, 1, 1, 2], [0], [0]>} : vector<1x8x16xbf16>, vector<1x16x8xbf16>, vector<1x8x8xf32> -> vector<1x8x8xf32>
    %81 = tpu.concatenate %35, %50, %65, %80 in 2 : vector<1x8x8xf32>, vector<1x8x8xf32>, vector<1x8x8xf32>, vector<1x8x8xf32> -> vector<1x8x32xf32>
    %82 = vector.shape_cast %81 : vector<1x8x32xf32> to vector<8x32xf32>
    %83 = arith.addf %82, %12 : vector<8x32xf32>
    %84 = arith.mulf %83, %83 : vector<8x32xf32>
    %cst_29 = arith.constant dense<0.000000e+00> : vector<8xf32>
    %85 = vector.multi_reduction <add>, %84, %cst_29 [1] : vector<8x32xf32> to vector<8xf32>
    %86 = vector.shape_cast %85 : vector<8xf32> to vector<8x1xf32>
    %87 = math.rsqrt %86 : vector<8x1xf32>
    %88 = vector.broadcast %87 : vector<8x1xf32> to vector<8x32xf32>
    %89 = arith.mulf %83, %88 : vector<8x32xf32>
    %c0_30 = arith.constant 0 : index
    %c0_31 = arith.constant 0 : index
    %90 = vector.load %arg6[%c0_30, %c0_31] : memref<8x32xf32, #tpu.memory_space<vmem>>, vector<8x32xf32>
    tpu.vector_store %arg6[%c0_30, %c0_31], %89 {strides = array<i32>} : memref<8x32xf32, #tpu.memory_space<vmem>>, vector<8x32xf32>,
    return
  }
  func.func @transform_0(%arg0: i32) -> (i32, i32) {
    %c0_i32 = arith.constant 0 : i32
    %c0_i32_0 = arith.constant 0 : i32
    return %arg0, %c0_i32 : i32, i32
  }
  func.func @transform_1(%arg0: i32) -> (i32, i32) {
    %c0_i32 = arith.constant 0 : i32
    %c0_i32_0 = arith.constant 0 : i32
    return %arg0, %c0_i32 : i32, i32
  }
  func.func @transform_2(%arg0: i32) -> (i32, i32) {
    %c0_i32 = arith.constant 0 : i32
    %c0_i32_0 = arith.constant 0 : i32
    %c0_i32_1 = arith.constant 0 : i32
    return %c0_i32, %c0_i32_0 : i32, i32
  }
  func.func @transform_3(%arg0: i32) -> (i32, i32) {
    %c0_i32 = arith.constant 0 : i32
    %c0_i32_0 = arith.constant 0 : i32
    %c0_i32_1 = arith.constant 0 : i32
    return %c0_i32, %c0_i32_0 : i32, i32
  }
  func.func @transform_4(%arg0: i32) -> (i32, i32) {
    %c0_i32 = arith.constant 0 : i32
    %c0_i32_0 = arith.constant 0 : i32
    %c0_i32_1 = arith.constant 0 : i32
    return %c0_i32, %c0_i32_0 : i32, i32
  }
  func.func @transform_5(%arg0: i32) -> (i32, i32) {
    %c0_i32 = arith.constant 0 : i32
    %c0_i32_0 = arith.constant 0 : i32
    return %arg0, %c0_i32 : i32, i32
  }
  func.func @transform_6(%arg0: i32) -> (i32, i32) {
    %c0_i32 = arith.constant 0 : i32
    %c0_i32_0 = arith.constant 0 : i32
    return %arg0, %c0_i32 : i32, i32
  }
}

</mosaic_0001>

<llo_original>
// kernel: tpu_custom_call.1
$region0: #{tpu_custom_call.1}
  #allocation0 [shape = 'u32[]', space=smem, size = 0x4, offset = 0x4, fixed_abs, tag = 'smem constant byte address 0x4 - core index']
  #allocation1 [shape = 'u32[72,128]{1,0:T(1,128)}', space=vmem, size = 0x9000, scoped, tag = 'internal scratch']
  %s0 = inlined_call_operand.hbm [shape: f32[16,32], index: 0, kind: input, shape index: {}]
  %s1 = inlined_call_operand.hbm [shape: bf16[32,32], index: 1, kind: input, shape index: {}]
  %s2 = inlined_call_operand.hbm [shape: bf16[32,32], index: 2, kind: input, shape index: {}]
  %s3 = inlined_call_operand.hbm [shape: bf16[32,32], index: 3, kind: input, shape index: {}]
  %s4 = inlined_call_operand.vmem [shape: f32[1,32], index: 4, kind: input, shape index: {}]
  %s5 = inlined_call_operand.hbm [shape: f32[16,32], index: 5, kind: output, shape index: {0}]
  %s6 = inlined_call_operand.hbm [shape: f32[32,32], index: 6, kind: output, shape index: {1}]
  %7 = xla_tuple %s5, %s6
  %s8 = sld [smem:[#allocation0]]
  $region77: #{tpu_custom_call.1} parent=0
    _
  %s10 = ssub.s32 1, %s8
  %s11 = scalar_select 0, %s10, %s8
  $region1: #{tpu_custom_call.1} parent=0
    #allocation2 [shape = 'u8[8192]{0}', space=vmem, size = 0x2000, scoped, tag = 'input window, operand 0']
    #allocation3 [shape = 's32[2]{0}', space=sflag, size = 0x8, scoped, tag = 'scoped memory for tpu_custom_call.1']
    #allocation4 [shape = 's32[2]{0}', space=sflag, size = 0x8, scoped, tag = 'scoped memory for tpu_custom_call.1']
    #allocation5 [shape = 'u8[8192]{0}', space=vmem, size = 0x2000, scoped, tag = 'input window, operand 1']
    #allocation6 [shape = 's32[2]{0}', space=sflag, size = 0x8, scoped, tag = 'scoped memory for tpu_custom_call.1']
    #allocation7 [shape = 'u8[8192]{0}', space=vmem, size = 0x2000, scoped, tag = 'input window, operand 2, single buffered']
    #allocation8 [shape = 'u8[8192]{0}', space=vmem, size = 0x2000, scoped, tag = 'input window, operand 3, single buffered']
    #allocation9 [shape = 's32[1]{0}', space=sflag, size = 0x4, scoped, tag = 'scoped memory for tpu_custom_call.1']
    #allocation10 [shape = 'u8[8192]{0}', space=vmem, size = 0x2000, scoped, tag = 'output window, operand 0']
    #allocation11 [shape = 'u8[16384]{0}', space=vmem, size = 0x4000, scoped, tag = 'output window, operand 1']
    #allocation12 [shape = 's32[2]{0}', space=sflag, size = 0x8, scoped, tag = 'scoped memory for tpu_custom_call.1']
    %12 = vsyncpa [#allocation3], 0
    %s13 = scalar_lea.sflag [#allocation3], 1
    %14 = vsyncpa %s13, 0
    %15 = vsyncpa [#allocation6], 0
    %s16 = scalar_lea.sflag [#allocation6], 1
    %17 = vsyncpa %s16, 0
    %18 = vsyncpa [#allocation9], 0
    %19 = vsyncpa [#allocation4], 0
    %s20 = scalar_lea.sflag [#allocation4], 1
    %21 = vsyncpa %s20, 0
    %22 = vsyncpa [#allocation12], 0
    %s23 = scalar_lea.sflag [#allocation12], 1
    %24 = vsyncpa %s23, 0
    loop: start=0, step=1, limit=4
    $region2: #{tpu_custom_call.1} parent=1 // loop_pre_header
      _
    $region3: #{tpu_custom_call.1} parent=1 // loop_header
      %s26 = sphi 0, %s30
      %p27 = scmp.ge.s32.totalorder %s26, 4
      %s36 = sphi 0, %s38
      %s39 = sphi 0, %s36
      %s40 = sphi 0, %s39
      %s56 = sphi 0, %s40
      %s62 = sphi 0, %s64
      %s65 = sphi 0, %s62
      %s66 = sphi 0, %s65
      %s82 = sphi 0, %s66
      %s86 = sphi 0, %s86
      %s88 = sphi 0, %s86
      %s89 = sphi 0, %s88
      %s103 = sphi 0, %s89
      %s107 = sphi 0, %s107
      %s109 = sphi 0, %s107
      %s110 = sphi 0, %s109
      %s124 = sphi 0, %s110
      %s128 = sphi 0, %s128
      %s130 = sphi 0, %s128
      %s131 = sphi 0, %s130
      %s145 = sphi 0, %s131
      %s151 = sphi 0, %s153
      %s154 = sphi 0, %s151
      %s155 = sphi 0, %s154
      %s171 = sphi 0, %s155
      %s177 = sphi 0, %s179
      %s180 = sphi 0, %s177
      %s181 = sphi 0, %s180
      %s197 = sphi 0, %s181
    $region4: #{tpu_custom_call.1} parent=1 // loop_header_branch
      %29 = sbr.rel (%p27) target = $region8
    $region5: #{tpu_custom_call.1} parent=1 // loop_body
      %s31 = ssub.s32 %s26, 1
      %s32 = ssub.s32 %s26, 2
      %s33 = sadd.s32 %s26, 1
      %s34 = ssub.s32 %s26, %s33
      %p35 = scmp.eq.s32.totalorder %s34, 0
      %s37 = sadd.s32 %s36, 1
      %s38 = scalar_select %p35, %s36, %s37
      %p41 = pneg %p35
      %p42 = scmp.eq.s32.totalorder %s26, 1
      %p43 = por %p41, %p42
      %p44 = scmp.ne.s32.totalorder %s36, %s39
      %p45 = scmp.eq.s32.totalorder %s26, 0
      %p46 = por %p44, %p45
      %p47 = scmp.ne.s32.totalorder %s36, %s39
      %p48 = scmp.eq.s32.totalorder %s31, 1
      %p49 = por %p47, %p48
      %p50 = scmp.ne.s32.totalorder %s39, %s40
      %p51 = scmp.eq.s32.totalorder %s31, 0
      %p52 = por %p50, %p51
      %p53 = scmp.ne.s32.totalorder %s39, %s40
      %p54 = scmp.eq.s32.totalorder %s32, 1
      %p55 = por %p53, %p54
      %p57 = scmp.ne.s32.totalorder %s40, %s56
      %p58 = scmp.eq.s32.totalorder %s32, 0
      %p59 = por %p57, %p58
      %s60 = ssub.s32 %s26, %s33
      %p61 = scmp.eq.s32.totalorder %s60, 0
      %s63 = sadd.s32 %s62, 1
      %s64 = scalar_select %p61, %s62, %s63
      %p67 = pneg %p61
      %p68 = scmp.eq.s32.totalorder %s26, 1
      %p69 = por %p67, %p68
      %p70 = scmp.ne.s32.totalorder %s62, %s65
      %p71 = scmp.eq.s32.totalorder %s26, 0
      %p72 = por %p70, %p71
      %p73 = scmp.ne.s32.totalorder %s62, %s65
      %p74 = scmp.eq.s32.totalorder %s31, 1
      %p75 = por %p73, %p74
      %p76 = scmp.ne.s32.totalorder %s65, %s66
      %p77 = scmp.eq.s32.totalorder %s31, 0
      %p78 = por %p76, %p77
      %p79 = scmp.ne.s32.totalorder %s65, %s66
      %p80 = scmp.eq.s32.totalorder %s32, 1
      %p81 = por %p79, %p80
      %p83 = scmp.ne.s32.totalorder %s66, %s82
      %p84 = scmp.eq.s32.totalorder %s32, 0
      %p85 = por %p83, %p84
      %s87 = sadd.s32 %s86, 1
      %p90 = scmp.eq.s32.totalorder %s26, 1
      %p91 = scmp.ne.s32.totalorder %s86, %s88
      %p92 = scmp.eq.s32.totalorder %s26, 0
      %p93 = por %p91, %p92
      %p94 = scmp.ne.s32.totalorder %s86, %s88
      %p95 = scmp.eq.s32.totalorder %s31, 1
      %p96 = por %p94, %p95
      %p97 = scmp.ne.s32.totalorder %s88, %s89
      %p98 = scmp.eq.s32.totalorder %s31, 0
      %p99 = por %p97, %p98
      %p100 = scmp.ne.s32.totalorder %s88, %s89
      %p101 = scmp.eq.s32.totalorder %s32, 1
      %p102 = por %p100, %p101
      %p104 = scmp.ne.s32.totalorder %s89, %s103
      %p105 = scmp.eq.s32.totalorder %s32, 0
      %p106 = por %p104, %p105
      %s108 = sadd.s32 %s107, 1
      %p111 = scmp.eq.s32.totalorder %s26, 1
      %p112 = scmp.ne.s32.totalorder %s107, %s109
      %p113 = scmp.eq.s32.totalorder %s26, 0
      %p114 = por %p112, %p113
      %p115 = scmp.ne.s32.totalorder %s107, %s109
      %p116 = scmp.eq.s32.totalorder %s31, 1
      %p117 = por %p115, %p116
      %p118 = scmp.ne.s32.totalorder %s109, %s110
      %p119 = scmp.eq.s32.totalorder %s31, 0
      %p120 = por %p118, %p119
      %p121 = scmp.ne.s32.totalorder %s109, %s110
      %p122 = scmp.eq.s32.totalorder %s32, 1
      %p123 = por %p121, %p122
      %p125 = scmp.ne.s32.totalorder %s110, %s124
      %p126 = scmp.eq.s32.totalorder %s32, 0
      %p127 = por %p125, %p126
      %s129 = sadd.s32 %s128, 1
      %p132 = scmp.eq.s32.totalorder %s26, 1
      %p133 = scmp.ne.s32.totalorder %s128, %s130
      %p134 = scmp.eq.s32.totalorder %s26, 0
      %p135 = por %p133, %p134
      %p136 = scmp.ne.s32.totalorder %s128, %s130
      %p137 = scmp.eq.s32.totalorder %s31, 1
      %p138 = por %p136, %p137
      %p139 = scmp.ne.s32.totalorder %s130, %s131
      %p140 = scmp.eq.s32.totalorder %s31, 0
      %p141 = por %p139, %p140
      %p142 = scmp.ne.s32.totalorder %s130, %s131
      %p143 = scmp.eq.s32.totalorder %s32, 1
      %p144 = por %p142, %p143
      %p146 = scmp.ne.s32.totalorder %s131, %s145
      %p147 = scmp.eq.s32.totalorder %s32, 0
      %p148 = por %p146, %p147
      %s149 = ssub.s32 %s26, %s33
      %p150 = scmp.eq.s32.totalorder %s149, 0
      %s152 = sadd.s32 %s151, 1
      %s153 = scalar_select %p150, %s151, %s152
      %p156 = pneg %p150
      %p157 = scmp.eq.s32.totalorder %s26, 1
      %p158 = por %p156, %p157
      %p159 = scmp.ne.s32.totalorder %s151, %s154
      %p160 = scmp.eq.s32.totalorder %s26, 0
      %p161 = por %p159, %p160
      %p162 = scmp.ne.s32.totalorder %s151, %s154
      %p163 = scmp.eq.s32.totalorder %s31, 1
      %p164 = por %p162, %p163
      %p165 = scmp.ne.s32.totalorder %s154, %s155
      %p166 = scmp.eq.s32.totalorder %s31, 0
      %p167 = por %p165, %p166
      %p168 = scmp.ne.s32.totalorder %s154, %s155
      %p169 = scmp.eq.s32.totalorder %s32, 1
      %p170 = por %p168, %p169
      %p172 = scmp.ne.s32.totalorder %s155, %s171
      %p173 = scmp.eq.s32.totalorder %s32, 0
      %p174 = por %p172, %p173
      %s175 = ssub.s32 %s26, %s33
      %p176 = scmp.eq.s32.totalorder %s175, 0
      %s178 = sadd.s32 %s177, 1
      %s179 = scalar_select %p176, %s177, %s178
      %p182 = pneg %p176
      %p183 = scmp.eq.s32.totalorder %s26, 1
      %p184 = por %p182, %p183
      %p185 = scmp.ne.s32.totalorder %s177, %s180
      %p186 = scmp.eq.s32.totalorder %s26, 0
      %p187 = por %p185, %p186
      %p188 = scmp.ne.s32.totalorder %s177, %s180
      %p189 = scmp.eq.s32.totalorder %s31, 1
      %p190 = por %p188, %p189
      %p191 = scmp.ne.s32.totalorder %s180, %s181
      %p192 = scmp.eq.s32.totalorder %s31, 0
      %p193 = por %p191, %p192
      %p194 = scmp.ne.s32.totalorder %s180, %s181
      %p195 = scmp.eq.s32.totalorder %s32, 1
      %p196 = por %p194, %p195
      %p198 = scmp.ne.s32.totalorder %s181, %s197
      %p199 = scmp.eq.s32.totalorder %s32, 0
      %p200 = por %p198, %p199
      %p201 = scmp.le.s32.totalorder 1, %s26
      %p202 = scmp.lt.s32.totalorder %s26, 3
      %p203 = pnand %p201, %p202
      %p204 = pneg %p203
      // Predicated region
      $region9: #{tpu_custom_call.1} parent=5 // pred_check
        _
      $region10: #{tpu_custom_call.1} parent=5 // pred_check_branch
        %206 = sbr.rel (%p203) target = $region12
      $region11: #{tpu_custom_call.1} parent=5 // pred_region
        %s207 = ssub.s32 %s26, 1
        // Predicated region
        $region13: #{tpu_custom_call.1} parent=11 // pred_check
          %p208 = pneg %p99
        $region14: #{tpu_custom_call.1} parent=11 // pred_check_branch
          %210 = sbr.rel (%p208) target = $region16
        $region15: #{tpu_custom_call.1} parent=11 // pred_region
          %212 = vsyncadd [#allocation6], 0
          %s213 = sshll.u32 %s2, 4
          %s214 = int_to_ptr.hbm [resolvable:$true] %s213
          %s215 = sshll.u32 [#allocation7], 4
          %s216 = int_to_ptr.vmem [resolvable:$true] %s215
          %221 = dma.hbm_to_vmem [thread:$0]  %s214, 256, %s216, [#allocation6], 64, 64, 4
        $region16: #{tpu_custom_call.1} parent=11 // pred_fallthru
          _
        // Predicated region
        $region17: #{tpu_custom_call.1} parent=11 // pred_check
          %p222 = pneg %p120
        $region18: #{tpu_custom_call.1} parent=11 // pred_check_branch
          %224 = sbr.rel (%p222) target = $region20
        $region19: #{tpu_custom_call.1} parent=11 // pred_region
          %226 = vsyncadd [#allocation9], 0
          %s227 = sshll.u32 %s3, 4
          %s228 = int_to_ptr.hbm [resolvable:$true] %s227
          %s229 = sshll.u32 [#allocation8], 4
          %s230 = int_to_ptr.vmem [resolvable:$true] %s229
          %235 = dma.hbm_to_vmem [thread:$0]  %s228, 256, %s230, [#allocation9], 64, 64, 4
        $region20: #{tpu_custom_call.1} parent=11 // pred_fallthru
          _
        // Predicated region
        $region21: #{tpu_custom_call.1} parent=11 // pred_check
          %p236 = pneg %p141
        $region22: #{tpu_custom_call.1} parent=11 // pred_check_branch
          %238 = sbr.rel (%p236) target = $region24
        $region23: #{tpu_custom_call.1} parent=11 // pred_region
          _
        $region24: #{tpu_custom_call.1} parent=11 // pred_fallthru
          _
      $region12: #{tpu_custom_call.1} parent=5 // pred_fallthru
        _
      %p239 = scmp.lt.s32.totalorder %s26, 2
      // Predicated region
      $region25: #{tpu_custom_call.1} parent=5 // pred_check
        %p240 = pneg %p239
      $region26: #{tpu_custom_call.1} parent=5 // pred_check_branch
        %242 = sbr.rel (%p240) target = $region28
      $region27: #{tpu_custom_call.1} parent=5 // pred_region
        // Predicated region
        $region29: #{tpu_custom_call.1} parent=27 // pred_check
          %p243 = pneg %p46
        $region30: #{tpu_custom_call.1} parent=27 // pred_check_branch
          %245 = sbr.rel (%p243) target = $region32
        $region31: #{tpu_custom_call.1} parent=27 // pred_region
          %s246 = sand.u32 %s36, 1
          %s247 = scalar_lea.sflag [#allocation3], %s246
          %s248 = sand.u32 %s36, 1
          %s249 = smul.addr %s248, 8
          %s250 = scalar_lea.vmem [#allocation2], %s249
          %252 = vsyncadd %s247, 0
          %s253 = smul.addr %s26, 8
          %s254 = scalar_lea.hbm %s0, %s253
          %s256 = sshll.u32 %s254, 4
          %s257 = int_to_ptr.hbm [resolvable:$true] %s256
          %s258 = sshll.u32 %s250, 4
          %s259 = int_to_ptr.vmem [resolvable:$true] %s258
          %261 = dma.hbm_to_vmem [thread:$0]  %s257, 128, %s259, %s247
        $region32: #{tpu_custom_call.1} parent=27 // pred_fallthru
          _
        // Predicated region
        $region33: #{tpu_custom_call.1} parent=27 // pred_check
          %p262 = pneg %p72
        $region34: #{tpu_custom_call.1} parent=27 // pred_check_branch
          %264 = sbr.rel (%p262) target = $region36
        $region35: #{tpu_custom_call.1} parent=27 // pred_region
          %s265 = sand.u32 %s26, 1
          %s266 = scalar_lea.sflag [#allocation6], %s265
          %s267 = sand.u32 %s62, 1
          %s268 = smul.addr %s267, 8
          %s269 = scalar_lea.vmem [#allocation5], %s268
          %s270 = smul.u32 2, %s26
          %272 = vsyncadd %s266, 0
          %s273 = smul.addr %s270, 4
          %s274 = scalar_lea.hbm %s1, %s273
          %s275 = sshll.u32 %s274, 4
          %s276 = int_to_ptr.hbm [resolvable:$true] %s275
          %s277 = sshll.u32 %s269, 4
          %s278 = int_to_ptr.vmem [resolvable:$true] %s277
          %283 = dma.hbm_to_vmem [thread:$0]  %s276, 128, %s278, %s266, 64, 64, 4
        $region36: #{tpu_custom_call.1} parent=27 // pred_fallthru
          _
      $region28: #{tpu_custom_call.1} parent=5 // pred_fallthru
        _
      %p284 = scmp.le.s32.totalorder 1, %s26
      %p285 = scmp.lt.s32.totalorder %s26, 3
      %p286 = pnand %p284, %p285
      %p287 = pneg %p286
      // Predicated region
      $region37: #{tpu_custom_call.1} parent=5 // pred_check
        _
      $region38: #{tpu_custom_call.1} parent=5 // pred_check_branch
        %289 = sbr.rel (%p286) target = $region40
      $region39: #{tpu_custom_call.1} parent=5 // pred_region
        %s290 = ssub.s32 %s26, 1
        %s291 = sand.u32 %s39, 1
        %s292 = scalar_lea.sflag [#allocation3], %s291
        %s293 = sand.u32 %s39, 1
        %s294 = smul.addr %s293, 8
        %s295 = scalar_lea.vmem [#allocation2], %s294
        // Predicated region
        $region41: #{tpu_custom_call.1} parent=39 // pred_check
          %p296 = pneg %p52
        $region42: #{tpu_custom_call.1} parent=39 // pred_check_branch
          %298 = sbr.rel (%p296) target = $region44
        $region43: #{tpu_custom_call.1} parent=39 // pred_region
          %300 = dma.done %s292, 128
        $region44: #{tpu_custom_call.1} parent=39 // pred_fallthru
          _
        %s301 = sand.u32 %s31, 1
        %s302 = scalar_lea.sflag [#allocation6], %s301
        %s303 = sand.u32 %s65, 1
        %s304 = smul.addr %s303, 8
        %s305 = scalar_lea.vmem [#allocation5], %s304
        // Predicated region
        $region45: #{tpu_custom_call.1} parent=39 // pred_check
          %p306 = pneg %p78
        $region46: #{tpu_custom_call.1} parent=39 // pred_check_branch
          %308 = sbr.rel (%p306) target = $region48
        $region47: #{tpu_custom_call.1} parent=39 // pred_region
          %310 = dma.done %s302, 128
        $region48: #{tpu_custom_call.1} parent=39 // pred_fallthru
          _
        // Predicated region
        $region49: #{tpu_custom_call.1} parent=39 // pred_check
          %p311 = pneg %p99
        $region50: #{tpu_custom_call.1} parent=39 // pred_check_branch
          %313 = sbr.rel (%p311) target = $region52
        $region51: #{tpu_custom_call.1} parent=39 // pred_region
          %315 = dma.done [#allocation6], 256
        $region52: #{tpu_custom_call.1} parent=39 // pred_fallthru
          _
        // Predicated region
        $region53: #{tpu_custom_call.1} parent=39 // pred_check
          %p316 = pneg %p120
        $region54: #{tpu_custom_call.1} parent=39 // pred_check_branch
          %318 = sbr.rel (%p316) target = $region56
        $region55: #{tpu_custom_call.1} parent=39 // pred_region
          %320 = dma.done [#allocation9], 256
        $region56: #{tpu_custom_call.1} parent=39 // pred_fallthru
          _
        %s321 = sand.u32 %s39, 1
        %s322 = scalar_lea.sflag [#allocation3], %s321
        %s323 = sand.u32 %s39, 1
        %s324 = smul.addr %s323, 8
        %s325 = scalar_lea.vmem [#allocation2], %s324
        %p326 = pneg %p52
        %p327 = pneg %p49
        %s328 = sand.u32 %s31, 1
        %s329 = scalar_lea.sflag [#allocation6], %s328
        %s330 = sand.u32 %s65, 1
        %s331 = smul.addr %s330, 8
        %s332 = scalar_lea.vmem [#allocation5], %s331
        %p333 = pneg %p78
        %p334 = pneg %p75
        %p335 = pneg %p99
        %p336 = pneg %p96
        %p337 = pneg %p120
        %p338 = pneg %p117
        %p339 = pneg %p141
        %p340 = pneg %p138
        %p341 = pneg %p167
        %p342 = pneg %p164
        %s343 = sand.u32 %s154, 1
        %s344 = scalar_lea.sflag [#allocation4], %s343
        %s345 = sand.u32 %s154, 1
        %s346 = smul.addr %s345, 8
        %s347 = scalar_lea.vmem [#allocation10], %s346
        %p348 = pneg %p193
        %p349 = pneg %p190
        %s350 = sand.u32 %s180, 1
        %s351 = scalar_lea.sflag [#allocation12], %s350
        %s352 = sand.u32 %s180, 1
        %s353 = smul.addr %s352, 16
        %s354 = scalar_lea.vmem [#allocation11], %s353
        %s355 = smul.u32 2, %s31
        %s356 = smul.u32 2, %s31
        %v358 = vld [vmem:[#allocation7] sm:$0xf]
        %v359 = vld [vmem:[#allocation7 + $0x4] sm:$0xf]
        %v360 = vld [vmem:[#allocation7 + $0x8] sm:$0xf]
        %v361 = vld [vmem:[#allocation7 + $0xc] sm:$0xf]
        %v362 = vld [vmem:[#allocation8] sm:$0xf]
        %v363 = vld [vmem:[#allocation8 + $0x4] sm:$0xf]
        %v364 = vld [vmem:[#allocation8 + $0x8] sm:$0xf]
        %v365 = vld [vmem:[#allocation8 + $0xc] sm:$0xf]
        %v366 = vld [vmem:[%s4] sm:$0x1]
        %v367 = vld [vmem:[%s305] sm:$0xf]
        %v368 = vld [vmem:[%s305 + $0x4] sm:$0xf]
        %v371 = vunpack.c.l.b16 %v367
        %v372 = vunpack.c.l.b16 %v368
        %v373 = vpack.c.b16 %v372, %v371
        %v378 = vunpack.c.l.b16 %v358
        %v379 = vunpack.c.l.b16 %v359
        %v380 = vunpack.c.l.b16 %v360
        %v381 = vunpack.c.l.b16 %v361
        %v382 = vpack.c.b16 %v379, %v378
        %v383 = vpack.c.b16 %v381, %v380
        %vm386 = vcmask 261120
        %v388 = vsel %vm386, %v373, 0
        %390 = vmatpush.bf16.msra.mxu0 0
        %391 = vmatpush.bf16.msra.mxu0 0
        %392 = vmatpush.bf16.msra.mxu0 0
        %393 = vmatpush.bf16.msra.mxu0 0
        %394 = vmatpush.bf16.msra.mxu0 0
        %395 = vmatpush.bf16.msra.mxu0 0
        %396 = vmatpush.bf16.msra.mxu0 %v383
        %397 = vmatpush.bf16.msra.mxu0 %v382
        %398 = vmatmul.bf16.gmra.mxu0 %v388
        %v399 = vpop.f32.mrf.mxu0
        %v400 = vadd.f32 0.0, %v399
        %v401 = vpop.f32.mrf.mxu0
        %v402 = vadd.f32 0.0, %v401
        %403 = vdwg.mxu0
        %v404 = vmul.f32 %v400, %v400
        %v405 = vmul.f32 %v402, %v402
        %v406 = vsel %vm386, %v404, 0.0
        %407 = vadd.xlane.f32.xlu0 %v406
        %v408 = vpop.xlane.xlu0 %407
        %v409 = vsel %vm386, %v405, 0.0
        %410 = vadd.xlane.f32.xlu0 %v409
        %v411 = vpop.xlane.xlu0 %410
        %v412 = vrsqrt.pop %v408
        %v413 = vmul.f32 %v412, %v408
        %v414 = vmul.f32 %v413, %v412
        %v415 = vmul.f32 0.5, %v414
        %v416 = vsub.f32 1.5, %v415
        %v417 = vmul.f32 %v412, %v416
        %vm418 = vweird.f32 %v408
        %vm419 = vweird.f32 %v412
        %vm420 = vmor %vm418, %vm419
        %v421 = vsel %vm420, %v412, %v417
        %v422 = vrsqrt.pop %v411
        %v423 = vmul.f32 %v422, %v411
        %v424 = vmul.f32 %v423, %v422
        %v425 = vmul.f32 0.5, %v424
        %v426 = vsub.f32 1.5, %v425
        %v427 = vmul.f32 %v422, %v426
        %vm428 = vweird.f32 %v411
        %vm429 = vweird.f32 %v422
        %vm430 = vmor %vm428, %vm429
        %v431 = vsel %vm430, %v422, %v427
        %v432 = vmul.f32 %v400, %v421
        %v433 = vmul.f32 %v402, %v431
        %434 = vst.msk [vmem:[%s354] sm:$0xff] %vm386, %v432
        %435 = vst.msk [vmem:[%s354 + $0x8] sm:$0xff] %vm386, %v433
        %v436 = vld [vmem:[%s295] sm:$0xff]
        %v437 = vpack.c.bf16 %v436, %v436
        %v439 = vperm.slane %v366, 0
        %v445 = vunpack.c.l.b16 %v362
        %v446 = vunpack.c.l.b16 %v363
        %v447 = vunpack.c.l.b16 %v364
        %v448 = vunpack.c.l.b16 %v365
        %v449 = vpack.c.b16 %v446, %v445
        %v450 = vpack.c.b16 %v448, %v447
        %v454 = vsel %vm386, %v437, 0
        %456 = vmatpush.bf16.msra.mxu0 0
        %457 = vmatpush.bf16.msra.mxu0 0
        %458 = vmatpush.bf16.msra.mxu0 0
        %459 = vmatpush.bf16.msra.mxu0 0
        %460 = vmatpush.bf16.msra.mxu0 0
        %461 = vmatpush.bf16.msra.mxu0 0
        %462 = vmatpush.bf16.msra.mxu0 %v450
        %463 = vmatpush.bf16.msra.mxu0 %v449
        %464 = vmatmul.bf16.gmra.mxu0 %v454
        %v465 = vpop.f32.mrf.mxu0
        %v466 = vadd.f32 %v439, %v465
        %v467 = vpop.f32.mrf.mxu0
        %468 = vdwg.mxu0
        %v469 = vpack.c.bf16 %v466, %v466
        %v470 = vpack.c.bf16 %v432, %v432
        %v471 = vpack.c.bf16 %v433, %v433
        %v474 = vunpack.c.l.b16 %v470
        %v475 = vunpack.c.l.b16 %v471
        %v476 = vpack.c.b16 %v475, %v474
        %vm477 = vcmask 64512
        %v479 = vsel %vm477, %v469, 0
        %v482 = vsel %vm477, %v476, 0
        %484 = vmatpush.bf16.xpose.msra.mxu0 0
        %485 = vmatpush.bf16.xpose.msra.mxu0 0
        %486 = vmatpush.bf16.xpose.msra.mxu0 0
        %487 = vmatpush.bf16.xpose.msra.mxu0 0
        %488 = vmatpush.bf16.xpose.msra.mxu0 0
        %489 = vmatpush.bf16.xpose.msra.mxu0 0
        %490 = vmatpush.bf16.xpose.msra.mxu0 0
        %491 = vmatpush.bf16.xpose.msra.mxu0 %v482
        %492 = vmatmul.bf16.gmra.mxu0 %v479
        %v493 = vpop.f32.mrf.mxu0
        %v494 = vadd.f32 0.0, %v493
        %v495 = vpop.f32.mrf.mxu0
        %496 = vdwg.mxu0
        %vm497 = vcmask 130048
        %v498 = vsel %vm497, %v494, -inf
        %499 = vmax.xlane.f32.xlu0 %v498
        %v500 = vpop.xlane.xlu0 %499
        %v501 = vsub.f32 %v494, %v500
        %v502 = vmul.f32 %v501, 1.442695
        %v503 = vpow.pop %v502
        %v504 = vsel %vm497, %v503, 0.0
        %505 = vadd.xlane.f32.xlu0 %v504
        %v506 = vpop.xlane.xlu0 %505
        %v507 = vrcp.pop %v506
        %v508 = vmul.f32 %v503, %v507
        %v509 = vpack.c.bf16 %v508, %v508
        %v512 = vsel %vm497, %v509, 0
        %514 = vmatpush.bf16.msra.mxu0 0
        %515 = vmatpush.bf16.msra.mxu0 0
        %516 = vmatpush.bf16.msra.mxu0 0
        %517 = vmatpush.bf16.msra.mxu0 0
        %518 = vmatpush.bf16.msra.mxu0 0
        %519 = vmatpush.bf16.msra.mxu0 0
        %520 = vmatpush.bf16.msra.mxu0 0
        %521 = vmatpush.bf16.msra.mxu0 %v476
        %522 = vmatmul.bf16.gmra.mxu0 %v512
        %v523 = vpop.f32.mrf.mxu0
        %v524 = vadd.f32 0.0, %v523
        %v525 = vpop.f32.mrf.mxu0
        %526 = vdwg.mxu0
        %v528 = vunpack.c.l.b16 %v469
        %v529 = vpack.c.b16 %v528, %v528
        %530 = vrot.lane.b32.xlu0 %v529, 120
        %v531 = vpop.permute.xlu0 %530
        %532 = vrot.lane.b32.xlu0 %v476, 120
        %v533 = vpop.permute.xlu0 %532
        %v535 = vsel %vm477, %v531, 0
        %v538 = vsel %vm477, %v533, 0
        %540 = vmatpush.bf16.xpose.msra.mxu0 0
        %541 = vmatpush.bf16.xpose.msra.mxu0 0
        %542 = vmatpush.bf16.xpose.msra.mxu0 0
        %543 = vmatpush.bf16.xpose.msra.mxu0 0
        %544 = vmatpush.bf16.xpose.msra.mxu0 0
        %545 = vmatpush.bf16.xpose.msra.mxu0 0
        %546 = vmatpush.bf16.xpose.msra.mxu0 0
        %547 = vmatpush.bf16.xpose.msra.mxu0 %v538
        %548 = vmatmul.bf16.gmra.mxu0 %v535
        %v549 = vpop.f32.mrf.mxu0
        %v550 = vadd.f32 0.0, %v549
        %v551 = vpop.f32.mrf.mxu0
        %552 = vdwg.mxu0
        %v553 = vsel %vm497, %v550, -inf
        %554 = vmax.xlane.f32.xlu0 %v553
        %v555 = vpop.xlane.xlu0 %554
        %v556 = vsub.f32 %v550, %v555
        %v557 = vmul.f32 %v556, 1.442695
        %v558 = vpow.pop %v557
        %v559 = vsel %vm497, %v558, 0.0
        %560 = vadd.xlane.f32.xlu0 %v559
        %v561 = vpop.xlane.xlu0 %560
        %v562 = vrcp.pop %v561
        %v563 = vmul.f32 %v558, %v562
        %v564 = vpack.c.bf16 %v563, %v563
        %v567 = vsel %vm497, %v564, 0
        %569 = vmatpush.bf16.msra.mxu0 0
        %570 = vmatpush.bf16.msra.mxu0 0
        %571 = vmatpush.bf16.msra.mxu0 0
        %572 = vmatpush.bf16.msra.mxu0 0
        %573 = vmatpush.bf16.msra.mxu0 0
        %574 = vmatpush.bf16.msra.mxu0 0
        %575 = vmatpush.bf16.msra.mxu0 0
        %576 = vmatpush.bf16.msra.mxu0 %v533
        %577 = vmatmul.bf16.gmra.mxu0 %v567
        %v578 = vpop.f32.mrf.mxu0
        %v579 = vadd.f32 0.0, %v578
        %v580 = vpop.f32.mrf.mxu0
        %581 = vdwg.mxu0
        %582 = vrot.lane.b32.xlu0 %v529, 112
        %v583 = vpop.permute.xlu0 %582
        %584 = vrot.lane.b32.xlu0 %v476, 112
        %v585 = vpop.permute.xlu0 %584
        %v587 = vsel %vm477, %v583, 0
        %v590 = vsel %vm477, %v585, 0
        %592 = vmatpush.bf16.xpose.msra.mxu0 0
        %593 = vmatpush.bf16.xpose.msra.mxu0 0
        %594 = vmatpush.bf16.xpose.msra.mxu0 0
        %595 = vmatpush.bf16.xpose.msra.mxu0 0
        %596 = vmatpush.bf16.xpose.msra.mxu0 0
        %597 = vmatpush.bf16.xpose.msra.mxu0 0
        %598 = vmatpush.bf16.xpose.msra.mxu0 0
        %599 = vmatpush.bf16.xpose.msra.mxu0 %v590
        %600 = vmatmul.bf16.gmra.mxu0 %v587
        %v601 = vpop.f32.mrf.mxu0
        %v602 = vadd.f32 0.0, %v601
        %v603 = vpop.f32.mrf.mxu0
        %604 = vdwg.mxu0
        %v605 = vsel %vm497, %v602, -inf
        %606 = vmax.xlane.f32.xlu0 %v605
        %v607 = vpop.xlane.xlu0 %606
        %v608 = vsub.f32 %v602, %v607
        %v609 = vmul.f32 %v608, 1.442695
        %v610 = vpow.pop %v609
        %v611 = vsel %vm497, %v610, 0.0
        %612 = vadd.xlane.f32.xlu0 %v611
        %v613 = vpop.xlane.xlu0 %612
        %v614 = vrcp.pop %v613
        %v615 = vmul.f32 %v610, %v614
        %v616 = vpack.c.bf16 %v615, %v615
        %v619 = vsel %vm497, %v616, 0
        %621 = vmatpush.bf16.msra.mxu0 0
        %622 = vmatpush.bf16.msra.mxu0 0
        %623 = vmatpush.bf16.msra.mxu0 0
        %624 = vmatpush.bf16.msra.mxu0 0
        %625 = vmatpush.bf16.msra.mxu0 0
        %626 = vmatpush.bf16.msra.mxu0 0
        %627 = vmatpush.bf16.msra.mxu0 0
        %628 = vmatpush.bf16.msra.mxu0 %v585
        %629 = vmatmul.bf16.gmra.mxu0 %v619
        %v630 = vpop.f32.mrf.mxu0
        %v631 = vadd.f32 0.0, %v630
        %v632 = vpop.f32.mrf.mxu0
        %633 = vdwg.mxu0
        %634 = vrot.lane.b32.xlu0 %v529, 104
        %v635 = vpop.permute.xlu0 %634
        %636 = vrot.lane.b32.xlu0 %v476, 104
        %v637 = vpop.permute.xlu0 %636
        %v639 = vsel %vm477, %v635, 0
        %v642 = vsel %vm477, %v637, 0
        %644 = vmatpush.bf16.xpose.msra.mxu0 0
        %645 = vmatpush.bf16.xpose.msra.mxu0 0
        %646 = vmatpush.bf16.xpose.msra.mxu0 0
        %647 = vmatpush.bf16.xpose.msra.mxu0 0
        %648 = vmatpush.bf16.xpose.msra.mxu0 0
        %649 = vmatpush.bf16.xpose.msra.mxu0 0
        %650 = vmatpush.bf16.xpose.msra.mxu0 0
        %651 = vmatpush.bf16.xpose.msra.mxu0 %v642
        %652 = vmatmul.bf16.gmra.mxu0 %v639
        %v653 = vpop.f32.mrf.mxu0
        %v654 = vadd.f32 0.0, %v653
        %v655 = vpop.f32.mrf.mxu0
        %656 = vdwg.mxu0
        %v657 = vsel %vm497, %v654, -inf
        %658 = vmax.xlane.f32.xlu0 %v657
        %v659 = vpop.xlane.xlu0 %658
        %v660 = vsub.f32 %v654, %v659
        %v661 = vmul.f32 %v660, 1.442695
        %v662 = vpow.pop %v661
        %v663 = vsel %vm497, %v662, 0.0
        %664 = vadd.xlane.f32.xlu0 %v663
        %v665 = vpop.xlane.xlu0 %664
        %v666 = vrcp.pop %v665
        %v667 = vmul.f32 %v662, %v666
        %v668 = vpack.c.bf16 %v667, %v667
        %v671 = vsel %vm497, %v668, 0
        %673 = vmatpush.bf16.msra.mxu0 0
        %674 = vmatpush.bf16.msra.mxu0 0
        %675 = vmatpush.bf16.msra.mxu0 0
        %676 = vmatpush.bf16.msra.mxu0 0
        %677 = vmatpush.bf16.msra.mxu0 0
        %678 = vmatpush.bf16.msra.mxu0 0
        %679 = vmatpush.bf16.msra.mxu0 0
        %680 = vmatpush.bf16.msra.mxu0 %v637
        %681 = vmatmul.bf16.gmra.mxu0 %v671
        %v682 = vpop.f32.mrf.mxu0
        %v683 = vadd.f32 0.0, %v682
        %v684 = vpop.f32.mrf.mxu0
        %685 = vdwg.mxu0
        %687 = vrot.lane.b32.xlu0 %v579, 8
        %v688 = vpop.permute.xlu0 %687
        %691 = vrot.lane.b32.xlu0 %v631, 16
        %v692 = vpop.permute.xlu0 %691
        %695 = vrot.lane.b32.xlu0 %v683, 24
        %v696 = vpop.permute.xlu0 %695
        %v698 = vsel %vm477, %v524, %v688
        %v699 = vsel %vm497, %v698, %v692
        %vm700 = vcmask 195584
        %v701 = vsel %vm700, %v699, %v696
        %v702 = vadd.f32 %v701, %v436
        %v703 = vmul.f32 %v702, %v702
        %v704 = vsel %vm386, %v703, 0.0
        %705 = vadd.xlane.f32.xlu0 %v704
        %v706 = vpop.xlane.xlu0 %705
        %v707 = vrsqrt.pop %v706
        %v708 = vmul.f32 %v707, %v706
        %v709 = vmul.f32 %v708, %v707
        %v710 = vmul.f32 0.5, %v709
        %v711 = vsub.f32 1.5, %v710
        %v712 = vmul.f32 %v707, %v711
        %vm713 = vweird.f32 %v706
        %vm714 = vweird.f32 %v707
        %vm715 = vmor %vm713, %vm714
        %v716 = vsel %vm715, %v707, %v712
        %v717 = vmul.f32 %v702, %v716
        %718 = vst.msk [vmem:[%s347] sm:$0xff] %vm386, %v717
        %s719 = sand.u32 %s154, 1
        %s720 = scalar_lea.sflag [#allocation4], %s719
        %s721 = sand.u32 %s154, 1
        %s722 = smul.addr %s721, 8
        %s723 = scalar_lea.vmem [#allocation10], %s722
        %s724 = sand.u32 %s180, 1
        %s725 = scalar_lea.sflag [#allocation12], %s724
        %s726 = sand.u32 %s180, 1
        %s727 = smul.addr %s726, 16
        %s728 = scalar_lea.vmem [#allocation11], %s727
        // Predicated region
        $region57: #{tpu_custom_call.1} parent=39 // pred_check
          %p729 = pneg %p164
        $region58: #{tpu_custom_call.1} parent=39 // pred_check_branch
          %731 = sbr.rel (%p729) target = $region60
        $region59: #{tpu_custom_call.1} parent=39 // pred_region
          %733 = vsyncadd %s720, 0
          %s734 = smul.addr %s31, 8
          %s735 = scalar_lea.hbm %s5, %s734
          %s737 = sshll.u32 %s723, 4
          %s738 = int_to_ptr.vmem [resolvable:$true] %s737
          %s739 = sshll.u32 %s735, 4
          %s740 = int_to_ptr.hbm [resolvable:$true] %s739
          %742 = dma.vmem_to_hbm [thread:$0]  %s738, 128, %s740, %s720
        $region60: #{tpu_custom_call.1} parent=39 // pred_fallthru
          _
        // Predicated region
        $region61: #{tpu_custom_call.1} parent=39 // pred_check
          %p743 = pneg %p190
        $region62: #{tpu_custom_call.1} parent=39 // pred_check_branch
          %745 = sbr.rel (%p743) target = $region64
        $region63: #{tpu_custom_call.1} parent=39 // pred_region
          %s746 = smul.u32 2, %s31
          %748 = vsyncadd %s725, 0
          %s749 = smul.addr %s746, 8
          %s750 = scalar_lea.hbm %s6, %s749
          %s751 = sshll.u32 %s728, 4
          %s752 = int_to_ptr.vmem [resolvable:$true] %s751
          %s753 = sshll.u32 %s750, 4
          %s754 = int_to_ptr.hbm [resolvable:$true] %s753
          %759 = dma.vmem_to_hbm [thread:$0]  %s752, 256, %s754, %s725, 128, 128, 8
        $region64: #{tpu_custom_call.1} parent=39 // pred_fallthru
          _
      $region40: #{tpu_custom_call.1} parent=5 // pred_fallthru
        _
      %p760 = scmp.le.s32.totalorder 2, %s26
      // Predicated region
      $region65: #{tpu_custom_call.1} parent=5 // pred_check
        %p761 = pneg %p760
      $region66: #{tpu_custom_call.1} parent=5 // pred_check_branch
        %763 = sbr.rel (%p761) target = $region68
      $region67: #{tpu_custom_call.1} parent=5 // pred_region
        %s764 = ssub.s32 %s26, 2
        // Predicated region
        $region69: #{tpu_custom_call.1} parent=67 // pred_check
          %p765 = pneg %p170
        $region70: #{tpu_custom_call.1} parent=67 // pred_check_branch
          %767 = sbr.rel (%p765) target = $region72
        $region71: #{tpu_custom_call.1} parent=67 // pred_region
          %s768 = sand.u32 %s155, 1
          %s769 = scalar_lea.sflag [#allocation4], %s768
          %s770 = sand.u32 %s155, 1
          %s771 = smul.addr %s770, 8
          %s772 = scalar_lea.vmem [#allocation10], %s771
          %774 = dma.done %s769, 128
        $region72: #{tpu_custom_call.1} parent=67 // pred_fallthru
          _
        // Predicated region
        $region73: #{tpu_custom_call.1} parent=67 // pred_check
          %p775 = pneg %p196
        $region74: #{tpu_custom_call.1} parent=67 // pred_check_branch
          %777 = sbr.rel (%p775) target = $region76
        $region75: #{tpu_custom_call.1} parent=67 // pred_region
          %s778 = sand.u32 %s181, 1
          %s779 = scalar_lea.sflag [#allocation12], %s778
          %s780 = sand.u32 %s181, 1
          %s781 = smul.addr %s780, 16
          %s782 = scalar_lea.vmem [#allocation11], %s781
          %784 = dma.done %s779, 256
        $region76: #{tpu_custom_call.1} parent=67 // pred_fallthru
          _
      $region68: #{tpu_custom_call.1} parent=5 // pred_fallthru
        _
    $region6: #{tpu_custom_call.1} parent=1 // loop_footer
      %s30 = sadd.s32 1, %s26
    $region7: #{tpu_custom_call.1} parent=1 // loop_footer_branch
      %25 = sbr.rel target = $region3
    $region8: #{tpu_custom_call.1} parent=1 // loop_exit
      _
    %785 = vsyncpa [#allocation3], 1
    %s786 = scalar_lea.sflag [#allocation3], 1
    %787 = vsyncpa %s786, 1
    %788 = vsyncpa [#allocation6], 1
    %s789 = scalar_lea.sflag [#allocation6], 1
    %790 = vsyncpa %s789, 1
    %791 = vsyncpa [#allocation9], 1
    %792 = vsyncpa [#allocation4], 1
    %s793 = scalar_lea.sflag [#allocation4], 1
    %794 = vsyncpa %s793, 1
    %795 = vsyncpa [#allocation12], 1
    %s796 = scalar_lea.sflag [#allocation12], 1
    %797 = vsyncpa %s796, 1

</llo_original>
